<compile_context>
chip_gen: v5e
topology: v5e:2x2
jax: 0.10.0
libtpu: 0.0.40
codegen_flags: <defaults>
</compile_context>

<pallas_src>
import functools
import math

import jax
import jax.numpy as jnp
from jax.experimental import pallas as pl
from jax.experimental.pallas import tpu as pltpu


def _round_up(x, m):
    return ((x + m - 1) // m) * m


def _focal_loss_kernel(logits_ref, labels_ref, out_ref, *, gamma, n_rows):
    i = pl.program_id(0)
    rt = logits_ref.shape[0]

    @pl.when(i == 0)
    def _():
        out_ref[...] = jnp.zeros_like(out_ref)

    x = logits_ref[...]          # (rt, c_pad) f32
    lbl = labels_ref[...]        # (rt, 1) int32

    # Numerically-stable log-softmax pieces (padded classes are -1e30 -> exp == 0).
    m = jnp.max(x, axis=-1, keepdims=True)
    sum_ex = jnp.sum(jnp.exp(x - m), axis=-1, keepdims=True)
    lse = m + jnp.log(sum_ex)

    # Gather x[row, label[row]] via a one-hot mask against a lane iota.
    col = jax.lax.broadcasted_iota(jnp.int32, x.shape, 1)
    x_lbl = jnp.sum(jnp.where(col == lbl, x, 0.0), axis=-1, keepdims=True)

    logpt = x_lbl - lse                       # (rt, 1)
    pt = jnp.exp(logpt)
    loss = -((1.0 - pt) ** gamma) * logpt     # (rt, 1)

    # Mask rows beyond the true batch size (introduced by padding the batch dim).
    row = i * rt + jax.lax.broadcasted_iota(jnp.int32, (rt, 1), 0)
    loss = jnp.where(row < n_rows, loss, 0.0)

    # Accumulate the sum into the resident (1,1) output block.
    out_ref[...] += jnp.sum(loss, keepdims=True)

    @pl.when(i == pl.num_programs(0) - 1)
    def _():
        out_ref[...] = out_ref[...] * (1.0 / n_rows)


def focal_loss_pallas(logits, labels, *, gamma=2, row_tile=256):
    """logits: [batch, num_classes] float; labels: [batch] int. Returns scalar mean focal loss."""
    assert logits.ndim == 2 and labels.ndim == 1
    rows, num_classes = logits.shape

    # Lane-pad the class dim to a multiple of 128; size the row tile to the batch,
    # keeping it a multiple of 8 sublanes and within a conservative VMEM budget
    # (2x double-buffered logits tiles must fit comfortably even on v7x's 64 MiB).
    c_pad = _round_up(num_classes, 128)
    rt = min(row_tile, _round_up(rows, 8))
    max_tile_rows = max(8, ((16 * 1024 * 1024) // (2 * 4 * c_pad)) // 8 * 8)
    rt = min(rt, max_tile_rows)
    rows_pad = _round_up(rows, rt)
    # TODO(synk): for vocab-sized num_classes, add a second "arbitrary" grid axis
    # over class chunks with an online logsumexp instead of padding to one tile.

    x = logits.astype(jnp.float32)
    x = jnp.pad(x, ((0, 0), (0, c_pad - num_classes)), constant_values=-1e30)
    x = jnp.pad(x, ((0, rows_pad - rows), (0, 0)))

    lbl = labels.astype(jnp.int32).reshape(-1, 1)
    lbl = jnp.pad(lbl, ((0, rows_pad - rows), (0, 0)))

    cost = pl.CostEstimate(
        flops=8 * rows * num_classes,
        transcendentals=rows * (num_classes + 3),
        bytes_accessed=rows * num_classes * 4 + rows * 4 + 4,
    )

    out = pl.pallas_call(
        functools.partial(_focal_loss_kernel, gamma=gamma, n_rows=rows),
        out_shape=jax.ShapeDtypeStruct((1, 1), jnp.float32),
        grid_spec=pltpu.PrefetchScalarGridSpec(
            num_scalar_prefetch=0,
            grid=(rows_pad // rt,),
            in_specs=[
                pl.BlockSpec((rt, c_pad), lambda i: (i, 0)),
                pl.BlockSpec((rt, 1), lambda i: (i, 0)),
            ],
            out_specs=pl.BlockSpec((1, 1), lambda i: (0, 0)),
        ),
        compiler_params=pltpu.CompilerParams(
            dimension_semantics=("arbitrary",),  # output block accumulates across the grid
        ),
        cost_estimate=cost,
    )(x, lbl)

    return out[0, 0]


if __name__ == "__main__":
    # Small shapes consistent with the module: logits [batch, label_num], labels [batch].
    # batch deliberately not a multiple of 8 and label_num not a multiple of 128
    # to exercise the padding / masking paths.
    batch, num_classes = 37, 10

    key = jax.random.PRNGKey(0)
    klogits, klabels = jax.random.split(key)
    logits = 3.0 * jax.random.normal(klogits, (batch, num_classes), dtype=jnp.float32)
    labels = jax.random.randint(klabels, (batch,), 0, num_classes, dtype=jnp.int32)

    loss = focal_loss_pallas(logits, labels, gamma=2)
    loss = jax.block_until_ready(loss)

    # Pure-JAX reference (matches the PyTorch forward).
    logpt_all = jax.nn.log_softmax(logits, axis=1)
    logpt = jnp.take_along_axis(logpt_all, labels[:, None], axis=1)[:, 0]
    pt = jnp.exp(logpt)
    ref = jnp.mean(-((1.0 - pt) ** 2) * logpt)

    assert loss.shape == ()
    assert jnp.allclose(loss, ref, atol=1e-5, rtol=1e-5), (loss, ref)
    print("KERNEL_OK")
</pallas_src>

<mosaic_0001>
module attributes {stable_mosaic.version = 11 : i64} {
  func.func @_focal_loss_kernel(%arg0: i32, %arg1: memref<40x128xf32, #tpu.memory_space<vmem>>, %arg2: memref<40x1xi32, #tpu.memory_space<vmem>>, %arg3: memref<1x1xf32, #tpu.memory_space<vmem>>) attributes {dimension_semantics = [#tpu.dimension_semantics<arbitrary>], iteration_bounds = array<i64: 1>, scalar_prefetch = 0 : i64, scratch_operands = 0 : i64, tpu.core_type = #tpu.core_type<tc>, window_params = [{transform_indices = @transform_0, window_bounds = array<i64: 40, 128>}, {transform_indices = @transform_1, window_bounds = array<i64: 40, 1>}, {pipeline_mode = #tpu.pipeline_mode<synchronous>, transform_indices = @transform_2, window_bounds = array<i64: 1, 1>}]} {
    %c0_i32 = arith.constant 0 : i32
    %0 = arith.cmpi eq, %arg0, %c0_i32 : i32
    %1 = arith.extui %0 : i1 to i32
    %c0_i32_0 = arith.constant 0 : i32
    %2 = arith.cmpi ne, %1, %c0_i32_0 : i32
    scf.if %2 {
      %cst_17 = arith.constant 0.000000e+00 : f32
      %48 = vector.broadcast %cst_17 : f32 to vector<1x1xf32>
      %c0_18 = arith.constant 0 : index
      %c0_19 = arith.constant 0 : index
      %49 = vector.load %arg3[%c0_18, %c0_19] : memref<1x1xf32, #tpu.memory_space<vmem>>, vector<1x1xf32>
      tpu.vector_store %arg3[%c0_18, %c0_19], %48 {strides = array<i32>} : memref<1x1xf32, #tpu.memory_space<vmem>>, vector<1x1xf32>,
    } else {
    }
    %c0 = arith.constant 0 : index
    %c0_1 = arith.constant 0 : index
    %3 = vector.load %arg1[%c0, %c0_1] : memref<40x128xf32, #tpu.memory_space<vmem>>, vector<40x128xf32>
    %c0_2 = arith.constant 0 : index
    %c0_3 = arith.constant 0 : index
    %4 = vector.load %arg2[%c0_2, %c0_3] : memref<40x1xi32, #tpu.memory_space<vmem>>, vector<40x1xi32>
    %cst = arith.constant dense<0xFF800000> : vector<40xf32>
    %5 = vector.multi_reduction <maximumf>, %3, %cst [1] : vector<40x128xf32> to vector<40xf32>
    %6 = vector.shape_cast %5 : vector<40xf32> to vector<40x1xf32>
    %7 = vector.broadcast %6 : vector<40x1xf32> to vector<40x128xf32>
    %8 = arith.subf %3, %7 : vector<40x128xf32>
    %9 = math.exp %8 : vector<40x128xf32>
    %cst_4 = arith.constant dense<0.000000e+00> : vector<40xf32>
    %10 = vector.multi_reduction <add>, %9, %cst_4 [1] : vector<40x128xf32> to vector<40xf32>
    %11 = vector.shape_cast %10 : vector<40xf32> to vector<40x1xf32>
    %12 = math.log %11 : vector<40x1xf32>
    %13 = arith.addf %6, %12 : vector<40x1xf32>
    %14 = tpu.iota {dimensions = array<i32: 1>} : vector<40x128xi32>
    %15 = vector.broadcast %4 : vector<40x1xi32> to vector<40x128xi32>
    %16 = arith.cmpi eq, %14, %15 : vector<40x128xi32>
    %cst_5 = arith.constant 0.000000e+00 : f32
    %17 = vector.broadcast %cst_5 : f32 to vector<40x128xf32>
    %18 = arith.select %16, %3, %17 : vector<40x128xi1>, vector<40x128xf32>
    %cst_6 = arith.constant dense<0.000000e+00> : vector<40xf32>
    %19 = vector.multi_reduction <add>, %18, %cst_6 [1] : vector<40x128xf32> to vector<40xf32>
    %20 = vector.shape_cast %19 : vector<40xf32> to vector<40x1xf32>
    %21 = arith.subf %20, %13 : vector<40x1xf32>
    %22 = math.exp %21 : vector<40x1xf32>
    %cst_7 = arith.constant 1.000000e+00 : f32
    %23 = vector.broadcast %cst_7 : f32 to vector<40x1xf32>
    %24 = arith.subf %23, %22 : vector<40x1xf32>
    %25 = arith.mulf %24, %24 : vector<40x1xf32>
    %cst_8 = arith.constant 0.000000e+00 : f32
    %26 = vector.broadcast %cst_8 : f32 to vector<40x1xf32>
    %27 = arith.subf %26, %25 : vector<40x1xf32>
    %28 = arith.mulf %27, %21 : vector<40x1xf32>
    %c40_i32 = arith.constant 40 : i32
    %29 = arith.muli %arg0, %c40_i32 : i32
    %30 = tpu.iota {dimensions = array<i32: 0>} : vector<40x1xi32>
    %31 = vector.broadcast %29 : i32 to vector<40x1xi32>
    %32 = arith.addi %31, %30 : vector<40x1xi32>
    %c37_i32 = arith.constant 37 : i32
    %33 = vector.broadcast %c37_i32 : i32 to vector<40x1xi32>
    %34 = arith.cmpi slt, %32, %33 : vector<40x1xi32>
    %cst_9 = arith.constant 0.000000e+00 : f32
    %35 = vector.broadcast %cst_9 : f32 to vector<40x1xf32>
    %36 = arith.select %34, %28, %35 : vector<40x1xi1>, vector<40x1xf32>
    %c0_10 = arith.constant 0 : index
    %c0_11 = arith.constant 0 : index
    %37 = vector.load %arg3[%c0_10, %c0_11] : memref<1x1xf32, #tpu.memory_space<vmem>>, vector<1x1xf32>
    %38 = vector.shape_cast %36 : vector<40x1xf32> to vector<1x40x1xf32>
    %cst_12 = arith.constant dense<0.000000e+00> : vector<1xf32>
    %39 = vector.multi_reduction <add>, %38, %cst_12 [1, 2] : vector<1x40x1xf32> to vector<1xf32>
    %40 = vector.shape_cast %39 : vector<1xf32> to vector<1x1x1xf32>
    %41 = vector.extract %40[0, 0, 0] : f32 from vector<1x1x1xf32>
    %42 = vector.broadcast %41 : f32 to vector<1x1xf32>
    %43 = arith.addf %37, %42 : vector<1x1xf32>
    %c0_13 = arith.constant 0 : index
    %c0_14 = arith.constant 0 : index
    %44 = vector.load %arg3[%c0_13, %c0_14] : memref<1x1xf32, #tpu.memory_space<vmem>>, vector<1x1xf32>
    tpu.vector_store %arg3[%c0_13, %c0_14], %43 {strides = array<i32>} : memref<1x1xf32, #tpu.memory_space<vmem>>, vector<1x1xf32>,
    %c0_i32_15 = arith.constant 0 : i32
    %45 = arith.cmpi eq, %arg0, %c0_i32_15 : i32
    %46 = arith.extui %45 : i1 to i32
    %c0_i32_16 = arith.constant 0 : i32
    %47 = arith.cmpi ne, %46, %c0_i32_16 : i32
    scf.if %47 {
      %c0_17 = arith.constant 0 : index
      %c0_18 = arith.constant 0 : index
      %48 = vector.load %arg3[%c0_17, %c0_18] : memref<1x1xf32, #tpu.memory_space<vmem>>, vector<1x1xf32>
      %cst_19 = arith.constant 0.0270270277 : f32
      %49 = vector.broadcast %cst_19 : f32 to vector<1x1xf32>
      %50 = arith.mulf %48, %49 : vector<1x1xf32>
      %c0_20 = arith.constant 0 : index
      %c0_21 = arith.constant 0 : index
      %51 = vector.load %arg3[%c0_20, %c0_21] : memref<1x1xf32, #tpu.memory_space<vmem>>, vector<1x1xf32>
      tpu.vector_store %arg3[%c0_20, %c0_21], %50 {strides = array<i32>} : memref<1x1xf32, #tpu.memory_space<vmem>>, vector<1x1xf32>,
    } else {
    }
    return
  }
  func.func @transform_0(%arg0: i32) -> (i32, i32) {
    %c0_i32 = arith.constant 0 : i32
    %c0_i32_0 = arith.constant 0 : i32
    return %arg0, %c0_i32 : i32, i32
  }
  func.func @transform_1(%arg0: i32) -> (i32, i32) {
    %c0_i32 = arith.constant 0 : i32
    %c0_i32_0 = arith.constant 0 : i32
    return %arg0, %c0_i32 : i32, i32
  }
  func.func @transform_2(%arg0: i32) -> (i32, i32) {
    %c0_i32 = arith.constant 0 : i32
    %c0_i32_0 = arith.constant 0 : i32
    %c0_i32_1 = arith.constant 0 : i32
    return %c0_i32, %c0_i32_0 : i32, i32
  }
}

</mosaic_0001>

<llo_original>
// kernel: tpu_custom_call.1
$region0: #{tpu_custom_call.1}
  #allocation0 [shape = 'u32[]', space=smem, size = 0x4, offset = 0x4, fixed_abs, tag = 'smem constant byte address 0x4 - core index']
  #allocation1 [shape = 'u32[72,128]{1,0:T(1,128)}', space=vmem, size = 0x9000, scoped, tag = 'internal scratch']
  %s0 = inlined_call_operand.vmem [shape: f32[40,128], index: 0, kind: input, shape index: {}]
  %s1 = inlined_call_operand.vmem [shape: s32[40,1], index: 1, kind: input, shape index: {}]
  %s2 = inlined_call_operand.hbm [shape: f32[1,1], index: 2, kind: output, shape index: {}]
  %s3 = sld [smem:[#allocation0]]
  $region26: #{tpu_custom_call.1} parent=0
    _
  %s5 = ssub.s32 1, %s3
  %s6 = scalar_select 0, %s5, %s3
  $region1: #{tpu_custom_call.1} parent=0
    #allocation2 [shape = 'u8[512]{0}', space=vmem, size = 0x400, scoped, tag = 'output window, operand 0, single buffered']
    #allocation3 [shape = 's32[1]{0}', space=sflag, size = 0x4, scoped, tag = 'scoped memory for tpu_custom_call.1']
    %7 = vsyncpa [#allocation3], 0
    // Predicated region
    $region2: #{tpu_custom_call.1} parent=1 // pred_check
      _
    $region3: #{tpu_custom_call.1} parent=1 // pred_check_branch
      %9 = sbr.rel (0) target = $region5
    $region4: #{tpu_custom_call.1} parent=1 // pred_region
      _
    $region5: #{tpu_custom_call.1} parent=1 // pred_fallthru
      _
    // Predicated region
    $region6: #{tpu_custom_call.1} parent=1 // pred_check
      _
    $region7: #{tpu_custom_call.1} parent=1 // pred_check_branch
      %11 = sbr.rel (0) target = $region9
    $region8: #{tpu_custom_call.1} parent=1 // pred_region
      _
    $region9: #{tpu_custom_call.1} parent=1 // pred_fallthru
      _
    %p12 = scmp.eq.s32.totalorder 0, 0
    // Predicated region
    $region10: #{tpu_custom_call.1} parent=1 // pred_check
      %p13 = pneg %p12
    $region11: #{tpu_custom_call.1} parent=1 // pred_check_branch
      %15 = sbr.rel (%p13) target = $region13
    $region12: #{tpu_custom_call.1} parent=1 // pred_region
      %vm16 = vcmask 0
      %17 = vst.msk [vmem:[#allocation2] sm:$0x1] %vm16, 0.0
    $region13: #{tpu_custom_call.1} parent=1 // pred_fallthru
      _
    %v18 = vld [vmem:[%s0] sm:$0xff]
    %v19 = vld [vmem:[%s0 + $0x8] sm:$0xff]
    %v20 = vld [vmem:[%s0 + $0x10] sm:$0xff]
    %v21 = vld [vmem:[%s0 + $0x18] sm:$0xff]
    %v22 = vld [vmem:[%s0 + $0x20] sm:$0xff]
    %v23 = vld [vmem:[%s1] sm:$0xff]
    %v24 = vld [vmem:[%s1 + $0x8] sm:$0xff]
    %v25 = vld [vmem:[%s1 + $0x10] sm:$0xff]
    %v26 = vld [vmem:[%s1 + $0x18] sm:$0xff]
    %v27 = vld [vmem:[%s1 + $0x20] sm:$0xff]
    %28 = vmax.xlane.f32.xlu0 %v18
    %v29 = vpop.xlane.xlu0 %28
    %30 = vmax.xlane.f32.xlu0 %v19
    %v31 = vpop.xlane.xlu0 %30
    %32 = vmax.xlane.f32.xlu0 %v20
    %v33 = vpop.xlane.xlu0 %32
    %34 = vmax.xlane.f32.xlu0 %v21
    %v35 = vpop.xlane.xlu0 %34
    %36 = vmax.xlane.f32.xlu0 %v22
    %v37 = vpop.xlane.xlu0 %36
    %v38 = vsub.f32 %v18, %v29
    %v39 = vsub.f32 %v19, %v31
    %v40 = vsub.f32 %v20, %v33
    %v41 = vsub.f32 %v21, %v35
    %v42 = vsub.f32 %v22, %v37
    %v43 = vmul.f32 %v38, 1.442695
    %v44 = vpow.pop %v43
    %v45 = vmul.f32 %v39, 1.442695
    %v46 = vpow.pop %v45
    %v47 = vmul.f32 %v40, 1.442695
    %v48 = vpow.pop %v47
    %v49 = vmul.f32 %v41, 1.442695
    %v50 = vpow.pop %v49
    %v51 = vmul.f32 %v42, 1.442695
    %v52 = vpow.pop %v51
    %53 = vadd.xlane.f32.xlu0 %v44
    %v54 = vpop.xlane.xlu0 %53
    %55 = vadd.xlane.f32.xlu0 %v46
    %v56 = vpop.xlane.xlu0 %55
    %57 = vadd.xlane.f32.xlu0 %v48
    %v58 = vpop.xlane.xlu0 %57
    %59 = vadd.xlane.f32.xlu0 %v50
    %v60 = vpop.xlane.xlu0 %59
    %61 = vadd.xlane.f32.xlu0 %v52
    %v62 = vpop.xlane.xlu0 %61
    %v63 = vlog2.pop %v54
    %v64 = vmul.f32 %v63, 0.6931472
    %v65 = vlog2.pop %v56
    %v66 = vmul.f32 %v65, 0.6931472
    %v67 = vlog2.pop %v58
    %v68 = vmul.f32 %v67, 0.6931472
    %v69 = vlog2.pop %v60
    %v70 = vmul.f32 %v69, 0.6931472
    %v71 = vlog2.pop %v62
    %v72 = vmul.f32 %v71, 0.6931472
    %v73 = vadd.f32 %v29, %v64
    %v74 = vadd.f32 %v31, %v66
    %v75 = vadd.f32 %v33, %v68
    %v76 = vadd.f32 %v35, %v70
    %v77 = vadd.f32 %v37, %v72
    %v78 = vlaneseq
    %v79 = vand.u32 %v78, 127
    %80 = vset.pattern.permute.xlu0 0
    %81 = vperm.xlu0 %80, %v23
    %v82 = vpop.permute.xlu0 %81
    %83 = vset.pattern.permute.xlu0 0
    %84 = vperm.xlu0 %83, %v24
    %v85 = vpop.permute.xlu0 %84
    %86 = vset.pattern.permute.xlu0 0
    %87 = vperm.xlu0 %86, %v25
    %v88 = vpop.permute.xlu0 %87
    %89 = vset.pattern.permute.xlu0 0
    %90 = vperm.xlu0 %89, %v26
    %v91 = vpop.permute.xlu0 %90
    %92 = vset.pattern.permute.xlu0 0
    %93 = vperm.xlu0 %92, %v27
    %v94 = vpop.permute.xlu0 %93
    %vm95 = vcmp.eq.s32.totalorder %v79, %v82
    %vm96 = vcmp.eq.s32.totalorder %v79, %v85
    %vm97 = vcmp.eq.s32.totalorder %v79, %v88
    %vm98 = vcmp.eq.s32.totalorder %v79, %v91
    %vm99 = vcmp.eq.s32.totalorder %v79, %v94
    %v100 = vsel %vm95, %v18, 0.0
    %v101 = vsel %vm96, %v19, 0.0
    %v102 = vsel %vm97, %v20, 0.0
    %v103 = vsel %vm98, %v21, 0.0
    %v104 = vsel %vm99, %v22, 0.0
    %105 = vadd.xlane.f32.xlu0 %v100
    %v106 = vpop.xlane.xlu0 %105
    %107 = vadd.xlane.f32.xlu0 %v101
    %v108 = vpop.xlane.xlu0 %107
    %109 = vadd.xlane.f32.xlu0 %v102
    %v110 = vpop.xlane.xlu0 %109
    %111 = vadd.xlane.f32.xlu0 %v103
    %v112 = vpop.xlane.xlu0 %111
    %113 = vadd.xlane.f32.xlu0 %v104
    %v114 = vpop.xlane.xlu0 %113
    %v115 = vsub.f32 %v106, %v73
    %v116 = vsub.f32 %v108, %v74
    %v117 = vsub.f32 %v110, %v75
    %v118 = vsub.f32 %v112, %v76
    %v119 = vsub.f32 %v114, %v77
    %v120 = vmul.f32 %v115, 1.442695
    %v121 = vpow.pop %v120
    %v122 = vmul.f32 %v116, 1.442695
    %v123 = vpow.pop %v122
    %v124 = vmul.f32 %v117, 1.442695
    %v125 = vpow.pop %v124
    %v126 = vmul.f32 %v118, 1.442695
    %v127 = vpow.pop %v126
    %v128 = vmul.f32 %v119, 1.442695
    %v129 = vpow.pop %v128
    %v130 = vsub.f32 1.0, %v121
    %v131 = vsub.f32 1.0, %v123
    %v132 = vsub.f32 1.0, %v125
    %v133 = vsub.f32 1.0, %v127
    %v134 = vsub.f32 1.0, %v129
    %v135 = vmul.f32 %v130, %v130
    %v136 = vmul.f32 %v131, %v131
    %v137 = vmul.f32 %v132, %v132
    %v138 = vmul.f32 %v133, %v133
    %v139 = vmul.f32 %v134, %v134
    %v140 = vsub.f32 0.0, %v135
    %v141 = vsub.f32 0.0, %v136
    %v142 = vsub.f32 0.0, %v137
    %v143 = vsub.f32 0.0, %v138
    %v144 = vsub.f32 0.0, %v139
    %v145 = vmul.f32 %v140, %v115
    %v146 = vmul.f32 %v141, %v116
    %v147 = vmul.f32 %v142, %v117
    %v148 = vmul.f32 %v143, %v118
    %v149 = vmul.f32 %v144, %v119
    %s150 = smul.u32 0, 40
    %v151 = vlaneseq
    %v152 = vshrl.u32 %v151, 7
    %v153 = vadd.s32 %v152, 8
    %v154 = vadd.s32 %v152, 16
    %v155 = vadd.s32 %v152, 24
    %v156 = vadd.s32 %v152, 32
    %v157 = vstv %s150
    %v158 = vadd.s32 %v157, %v152
    %v159 = vadd.s32 %v157, %v153
    %v160 = vadd.s32 %v157, %v154
    %v161 = vadd.s32 %v157, %v155
    %v162 = vadd.s32 %v157, %v156
    %vm163 = vcmp.lt.s32.totalorder %v158, 37
    %vm164 = vcmp.lt.s32.totalorder %v159, 37
    %vm165 = vcmp.lt.s32.totalorder %v160, 37
    %vm166 = vcmp.lt.s32.totalorder %v161, 37
    %vm167 = vcmp.lt.s32.totalorder %v162, 37
    %v168 = vsel %vm163, %v145, 0.0
    %v169 = vsel %vm164, %v146, 0.0
    %v170 = vsel %vm165, %v147, 0.0
    %v171 = vsel %vm166, %v148, 0.0
    %v172 = vsel %vm167, %v149, 0.0
    %v173 = vld [vmem:[#allocation2] sm:$0x1]
    %vm174 = vcmask 7168
    %v175 = vsel %vm174, %v168, 0.0
    %v176 = vsel %vm174, %v169, 0.0
    %v177 = vadd.f32 %v175, %v176
    %v178 = vsel %vm174, %v170, 0.0
    %v179 = vadd.f32 %v177, %v178
    %v180 = vsel %vm174, %v171, 0.0
    %v181 = vadd.f32 %v179, %v180
    %v182 = vsel %vm174, %v172, 0.0
    %v183 = vadd.f32 %v181, %v182
    %184 = vadd.xlane.f32.xlu0 %v183
    %v185 = vpop.xlane.xlu0 %184
    %v186 = vrot.slane %v185, 4
    %v187 = vadd.f32 %v185, %v186
    %v188 = vrot.slane %v187, 2
    %v189 = vadd.f32 %v187, %v188
    %v190 = vrot.slane %v189, 1
    %v191 = vadd.f32 %v189, %v190
    %s192 = vtos %v191
    %v193 = vstv %s192
    %v194 = vadd.f32 %v173, %v193
    %vm195 = vcmask 0
    %196 = vst.msk [vmem:[#allocation2] sm:$0x1] %vm195, %v194
    // Predicated region
    $region14: #{tpu_custom_call.1} parent=1 // pred_check
      %p197 = pneg %p12
    $region15: #{tpu_custom_call.1} parent=1 // pred_check_branch
      %199 = sbr.rel (%p197) target = $region17
    $region16: #{tpu_custom_call.1} parent=1 // pred_region
      %v200 = vld [vmem:[#allocation2] sm:$0x1]
      %v201 = vmul.f32 %v200, 0.027027028
      %202 = vst.msk [vmem:[#allocation2] sm:$0x1] %vm195, %v201
    $region17: #{tpu_custom_call.1} parent=1 // pred_fallthru
      _
    // Predicated region
    $region18: #{tpu_custom_call.1} parent=1 // pred_check
      _
    $region19: #{tpu_custom_call.1} parent=1 // pred_check_branch
      %204 = sbr.rel (0) target = $region21
    $region20: #{tpu_custom_call.1} parent=1 // pred_region
      %206 = vsyncadd [#allocation3], 0
      %s208 = sshll.u32 [#allocation2], 4
      %s209 = int_to_ptr.vmem [resolvable:$true] %s208
      %s210 = sshll.u32 %s2, 4
      %s211 = int_to_ptr.hbm [resolvable:$true] %s210
      %213 = dma.vmem_to_hbm [thread:$0]  %s209, 16, %s211, [#allocation3]
    $region21: #{tpu_custom_call.1} parent=1 // pred_fallthru
      _
    // Predicated region
    $region22: #{tpu_custom_call.1} parent=1 // pred_check
      _
    $region23: #{tpu_custom_call.1} parent=1 // pred_check_branch
      %215 = sbr.rel (0) target = $region25
    $region24: #{tpu_custom_call.1} parent=1 // pred_region
      %217 = dma.done [#allocation3], 16
    $region25: #{tpu_custom_call.1} parent=1 // pred_fallthru
      _
    %218 = vsyncpa [#allocation3], 1

</llo_original>
